<compile_context>
chip_gen: v6e
topology: v6e:2x2x1
jax: 0.10.0
libtpu: 0.0.40
codegen_flags: <defaults>
</compile_context>

<pallas_src>
import functools

import jax
import jax.numpy as jnp
from jax.experimental import pallas as pl
from jax.experimental.pallas import tpu as pltpu


def _round_up(x, m):
    return ((x + m - 1) // m) * m


def _mlp_kernel(x_ref, w1_ref, b1_ref, w2_ref, b2_ref, o_ref):
    # fc1: cast the streamed f32 x tile to bf16 in-kernel; single-pass bf16 MXU
    # matmul with f32 accumulation.
    x_bf16 = x_ref[...].astype(jnp.bfloat16)
    h = jnp.dot(x_bf16, w1_ref[...], preferred_element_type=jnp.float32)
    # bias + ReLU in f32 on the VPU (no bf16 elementwise -> v5e-safe)
    h = jnp.maximum(h + b1_ref[...], 0.0)
    # fc2: bf16 x bf16 single-pass MXU matmul, f32 accumulation
    out = jnp.dot(h.astype(jnp.bfloat16), w2_ref[...],
                  preferred_element_type=jnp.float32)
    o_ref[...] = (out + b2_ref[...]).astype(o_ref.dtype)


@functools.partial(jax.jit, static_argnames=("tb",))
def my_model_forward(x, w1, b1, w2, b2, *, tb=8192):
    """Pallas forward pass for MyModel.

    x  : (B, n_features)        float32
    w1 : (n_features, n_hidden) float32 (transposed vs. torch fc1.weight)
    b1 : (1, n_hidden)          float32
    w2 : (n_hidden, n_classes)  float32 (transposed vs. torch fc2.weight)
    b2 : (1, n_classes)         float32
    returns (B, n_classes) float32
    """
    B, F = x.shape
    H = w1.shape[1]
    C = w2.shape[1]

    # Batch tile: 8-aligned (sublane), clamped to the (8-rounded) batch size.
    tb_eff = _round_up(min(tb, _round_up(B, 8)), 8)
    n_blocks = pl.cdiv(B, tb_eff)  # ragged last block handled by Pallas boundary masking

    # Tiny resident weights: cast once to bf16 so both matmuls are single-pass on the MXU.
    w1_b = w1.astype(jnp.bfloat16)
    w2_b = w2.astype(jnp.bfloat16)

    flops = 2 * B * (F * H + H * C)
    bytes_accessed = (
        x.size * 4 + w1_b.size * 2 + b1.size * 4 + w2_b.size * 2 + b2.size * 4
        + B * C * 4
    )

    out = pl.pallas_call(
        _mlp_kernel,
        out_shape=jax.ShapeDtypeStruct((B, C), jnp.float32),
        grid=(n_blocks,),
        in_specs=[
            pl.BlockSpec((tb_eff, F), lambda i: (i, 0)),  # x: streamed f32 batch tiles
            pl.BlockSpec((F, H), lambda i: (0, 0)),       # w1 (bf16): resident
            pl.BlockSpec((1, H), lambda i: (0, 0)),       # b1 (f32):  resident
            pl.BlockSpec((H, C), lambda i: (0, 0)),       # w2 (bf16): resident
            pl.BlockSpec((1, C), lambda i: (0, 0)),       # b2 (f32):  resident
        ],
        out_specs=pl.BlockSpec((tb_eff, C), lambda i: (i, 0)),  # dense (B, C) writeback
        compiler_params=pltpu.CompilerParams(
            dimension_semantics=("parallel",),
            vmem_limit_bytes=48 * 1024 * 1024,
        ),
        cost_estimate=pl.CostEstimate(
            flops=flops, transcendentals=0, bytes_accessed=bytes_accessed
        ),
    )(x, w1_b, b1, w2_b, b2)
    return out


def init_params(key, n_features=19, n_hidden=256, n_classes=2):
    """Deterministic init mimicking nn.Linear's U(-1/sqrt(fan_in), 1/sqrt(fan_in))."""
    k1, k2, k3, k4 = jax.random.split(key, 4)
    lim1 = 1.0 / jnp.sqrt(jnp.float32(n_features))
    lim2 = 1.0 / jnp.sqrt(jnp.float32(n_hidden))
    w1 = jax.random.uniform(k1, (n_features, n_hidden), jnp.float32, -lim1, lim1)
    b1 = jax.random.uniform(k2, (1, n_hidden), jnp.float32, -lim1, lim1)
    w2 = jax.random.uniform(k3, (n_hidden, n_classes), jnp.float32, -lim2, lim2)
    b2 = jax.random.uniform(k4, (1, n_classes), jnp.float32, -lim2, lim2)
    return w1, b1, w2, b2


def _reference(x, w1, b1, w2, b2):
    # Mirrors the kernel's math: bf16 operands on both matmuls, f32 accumulation,
    # f32 bias + ReLU.  (Deviates from pure-f32 nn.Linear at ~1e-2 relative level.)
    h = jnp.dot(x.astype(jnp.bfloat16), w1.astype(jnp.bfloat16),
                preferred_element_type=jnp.float32)
    h = jnp.maximum(h + b1, 0.0)
    return jnp.dot(h.astype(jnp.bfloat16), w2.astype(jnp.bfloat16),
                   preferred_element_type=jnp.float32) + b2


if __name__ == "__main__":
    key = jax.random.PRNGKey(0)
    kx, kp, kx2 = jax.random.split(key, 3)

    B, n_features, n_hidden, n_classes = 8, 19, 256, 2
    x = jax.random.normal(kx, (B, n_features), jnp.float32)
    w1, b1, w2, b2 = init_params(kp, n_features, n_hidden, n_classes)

    out = jax.block_until_ready(my_model_forward(x, w1, b1, w2, b2))
    ref = _reference(x, w1, b1, w2, b2)
    assert out.shape == (B, n_classes)
    assert jnp.allclose(out, ref, atol=1e-2, rtol=1e-2), "mismatch vs reference (B=8)"

    # Exercise the multi-block grid + ragged last block (B not a multiple of tb).
    B2 = 50
    x2 = jax.random.normal(kx2, (B2, n_features), jnp.float32)
    out2 = jax.block_until_ready(my_model_forward(x2, w1, b1, w2, b2, tb=16))
    ref2 = _reference(x2, w1, b1, w2, b2)
    assert out2.shape == (B2, n_classes)
    assert jnp.allclose(out2, ref2, atol=1e-2, rtol=1e-2), "mismatch vs reference (B=50)"

    print("KERNEL_OK")
</pallas_src>

<mosaic_0001>
module attributes {stable_mosaic.version = 11 : i64} {
  func.func @_mlp_kernel(%arg0: i32, %arg1: memref<8x19xf32, #tpu.memory_space<vmem>>, %arg2: memref<19x256xbf16, #tpu.memory_space<vmem>>, %arg3: memref<1x256xf32, #tpu.memory_space<vmem>>, %arg4: memref<256x2xbf16, #tpu.memory_space<vmem>>, %arg5: memref<1x2xf32, #tpu.memory_space<vmem>>, %arg6: memref<8x2xf32, #tpu.memory_space<vmem>>) attributes {dimension_semantics = [#tpu.dimension_semantics<parallel>], iteration_bounds = array<i64: 1>, scalar_prefetch = 0 : i64, scratch_operands = 0 : i64, tpu.core_type = #tpu.core_type<tc>, window_params = [{transform_indices = @transform_0, window_bounds = array<i64: 8, 19>}, {pipeline_mode = #tpu.pipeline_mode<synchronous>, transform_indices = @transform_1, window_bounds = array<i64: 19, 256>}, {pipeline_mode = #tpu.pipeline_mode<synchronous>, transform_indices = @transform_2, window_bounds = array<i64: 1, 256>}, {pipeline_mode = #tpu.pipeline_mode<synchronous>, transform_indices = @transform_3, window_bounds = array<i64: 256, 2>}, {pipeline_mode = #tpu.pipeline_mode<synchronous>, transform_indices = @transform_4, window_bounds = array<i64: 1, 2>}, {transform_indices = @transform_5, window_bounds = array<i64: 8, 2>}]} {
    %c0 = arith.constant 0 : index
    %c0_0 = arith.constant 0 : index
    %0 = vector.load %arg1[%c0, %c0_0] : memref<8x19xf32, #tpu.memory_space<vmem>>, vector<8x19xf32>
    %1 = arith.truncf %0 : vector<8x19xf32> to vector<8x19xbf16>
    %c0_1 = arith.constant 0 : index
    %c0_2 = arith.constant 0 : index
    %2 = vector.load %arg2[%c0_1, %c0_2] : memref<19x256xbf16, #tpu.memory_space<vmem>>, vector<19x256xbf16>
    %cst = arith.constant dense<0.000000e+00> : vector<8x256xf32>
    %3 = tpu.matmul %1, %2, %cst {dimension_numbers = #tpu.dot_dimension_numbers<[1], [0], [0], [1], [0, 0, 1, 1], [], []>} : vector<8x19xbf16>, vector<19x256xbf16>, vector<8x256xf32> -> vector<8x256xf32>
    %c0_3 = arith.constant 0 : index
    %c0_4 = arith.constant 0 : index
    %4 = vector.load %arg3[%c0_3, %c0_4] : memref<1x256xf32, #tpu.memory_space<vmem>>, vector<1x256xf32>
    %5 = vector.broadcast %4 : vector<1x256xf32> to vector<8x256xf32>
    %6 = arith.addf %3, %5 : vector<8x256xf32>
    %cst_5 = arith.constant 0.000000e+00 : f32
    %7 = vector.broadcast %cst_5 : f32 to vector<8x256xf32>
    %8 = arith.maximumf %6, %7 : vector<8x256xf32>
    %9 = arith.truncf %8 : vector<8x256xf32> to vector<8x256xbf16>
    %c0_6 = arith.constant 0 : index
    %c0_7 = arith.constant 0 : index
    %10 = vector.load %arg4[%c0_6, %c0_7] : memref<256x2xbf16, #tpu.memory_space<vmem>>, vector<256x2xbf16>
    %cst_8 = arith.constant dense<0.000000e+00> : vector<8x2xf32>
    %11 = tpu.matmul %9, %10, %cst_8 {dimension_numbers = #tpu.dot_dimension_numbers<[1], [0], [0], [1], [0, 0, 1, 1], [], []>} : vector<8x256xbf16>, vector<256x2xbf16>, vector<8x2xf32> -> vector<8x2xf32>
    %c0_9 = arith.constant 0 : index
    %c0_10 = arith.constant 0 : index
    %12 = vector.load %arg5[%c0_9, %c0_10] : memref<1x2xf32, #tpu.memory_space<vmem>>, vector<1x2xf32>
    %13 = vector.broadcast %12 : vector<1x2xf32> to vector<8x2xf32>
    %14 = arith.addf %11, %13 : vector<8x2xf32>
    %c0_11 = arith.constant 0 : index
    %c0_12 = arith.constant 0 : index
    %15 = vector.load %arg6[%c0_11, %c0_12] : memref<8x2xf32, #tpu.memory_space<vmem>>, vector<8x2xf32>
    tpu.vector_store %arg6[%c0_11, %c0_12], %14 {strides = array<i32>} : memref<8x2xf32, #tpu.memory_space<vmem>>, vector<8x2xf32>,
    return
  }
  func.func @transform_0(%arg0: i32) -> (i32, i32) {
    %c0_i32 = arith.constant 0 : i32
    %c0_i32_0 = arith.constant 0 : i32
    return %arg0, %c0_i32 : i32, i32
  }
  func.func @transform_1(%arg0: i32) -> (i32, i32) {
    %c0_i32 = arith.constant 0 : i32
    %c0_i32_0 = arith.constant 0 : i32
    %c0_i32_1 = arith.constant 0 : i32
    return %c0_i32, %c0_i32_0 : i32, i32
  }
  func.func @transform_2(%arg0: i32) -> (i32, i32) {
    %c0_i32 = arith.constant 0 : i32
    %c0_i32_0 = arith.constant 0 : i32
    %c0_i32_1 = arith.constant 0 : i32
    return %c0_i32, %c0_i32_0 : i32, i32
  }
  func.func @transform_3(%arg0: i32) -> (i32, i32) {
    %c0_i32 = arith.constant 0 : i32
    %c0_i32_0 = arith.constant 0 : i32
    %c0_i32_1 = arith.constant 0 : i32
    return %c0_i32, %c0_i32_0 : i32, i32
  }
  func.func @transform_4(%arg0: i32) -> (i32, i32) {
    %c0_i32 = arith.constant 0 : i32
    %c0_i32_0 = arith.constant 0 : i32
    %c0_i32_1 = arith.constant 0 : i32
    return %c0_i32, %c0_i32_0 : i32, i32
  }
  func.func @transform_5(%arg0: i32) -> (i32, i32) {
    %c0_i32 = arith.constant 0 : i32
    %c0_i32_0 = arith.constant 0 : i32
    return %arg0, %c0_i32 : i32, i32
  }
}

</mosaic_0001>

<llo_original>
// kernel: my_model_forward.1
$region0: #{my_model_forward.1}
  #allocation0 [shape = 'u32[]', space=smem, size = 0x4, offset = 0x4, fixed_abs, tag = 'smem constant byte address 0x4 - core index']
  #allocation1 [shape = 'u32[144,128]{1,0:T(1,128)}', space=vmem, size = 0x12000, scoped, tag = 'internal scratch']
  %s0 = inlined_call_operand.vmem [shape: f32[8,19], index: 0, kind: input, shape index: {}]
  %s1 = inlined_call_operand.vmem [shape: bf16[19,256], index: 1, kind: input, shape index: {}]
  %s2 = inlined_call_operand.vmem [shape: f32[1,256], index: 2, kind: input, shape index: {}]
  %s3 = inlined_call_operand.vmem [shape: bf16[256,2], index: 3, kind: input, shape index: {}]
  %s4 = inlined_call_operand.vmem [shape: f32[1,2], index: 4, kind: input, shape index: {}]
  %s5 = inlined_call_operand.vmem [shape: f32[8,2], index: 5, kind: output, shape index: {}]
  %s6 = sld [smem:[#allocation0]]
  $region30: #{my_model_forward.1} parent=0
    _
  %s8 = ssub.s32 1, %s6
  %s9 = scalar_select 0, %s8, %s6
  // Predicated region
  $region2: #{my_model_forward.1} parent=0 // pred_check
    _
  $region3: #{my_model_forward.1} parent=0 // pred_check_branch
    %11 = sbr.rel (0) target = $region5
  $region4: #{my_model_forward.1} parent=0 // pred_region
    _
  $region5: #{my_model_forward.1} parent=0 // pred_fallthru
    _
  // Predicated region
  $region6: #{my_model_forward.1} parent=0 // pred_check
    _
  $region7: #{my_model_forward.1} parent=0 // pred_check_branch
    %13 = sbr.rel (0) target = $region9
  $region8: #{my_model_forward.1} parent=0 // pred_region
    _
  $region9: #{my_model_forward.1} parent=0 // pred_fallthru
    _
  // Predicated region
  $region10: #{my_model_forward.1} parent=0 // pred_check
    _
  $region11: #{my_model_forward.1} parent=0 // pred_check_branch
    %15 = sbr.rel (0) target = $region13
  $region12: #{my_model_forward.1} parent=0 // pred_region
    _
  $region13: #{my_model_forward.1} parent=0 // pred_fallthru
    _
  // Predicated region
  $region14: #{my_model_forward.1} parent=0 // pred_check
    _
  $region15: #{my_model_forward.1} parent=0 // pred_check_branch
    %17 = sbr.rel (0) target = $region17
  $region16: #{my_model_forward.1} parent=0 // pred_region
    _
  $region17: #{my_model_forward.1} parent=0 // pred_fallthru
    _
  // Predicated region
  $region18: #{my_model_forward.1} parent=0 // pred_check
    _
  $region19: #{my_model_forward.1} parent=0 // pred_check_branch
    %19 = sbr.rel (0) target = $region21
  $region20: #{my_model_forward.1} parent=0 // pred_region
    _
  $region21: #{my_model_forward.1} parent=0 // pred_fallthru
    _
  %v21 = vld [vmem:[%s0] sm:$0xff]
  %v22 = vpack.c.bf16 %v21, %v21
  %v23 = vld [vmem:[%s1] sm:$0xff]
  %v24 = vld [vmem:[%s1 + $0x8] sm:$0xff]
  %v25 = vld [vmem:[%s1 + $0x10] sm:$0x33]
  %v26 = vld [vmem:[%s2] sm:$0x3]
  %v28 = vlaneseq
  %v29 = vshrl.u32 %v28, 7
  %v30 = vsub.s32 0, %v29
  %v31 = vrot.slane %v26, %v30
  %v32 = vlaneseq
  %v33 = vshrl.u32 %v32, 7
  %v34 = vsub.s32 1, %v33
  %v35 = vrot.slane %v26, %v34
  %v41 = vunpack.c.l.b16 %v23
  %v42 = vunpack.c.h.b16 %v23
  %v43 = vunpack.c.l.b16 %v24
  %v44 = vunpack.c.h.b16 %v24
  %v45 = vunpack.c.l.b16 %v25
  %v46 = vunpack.c.h.b16 %v25
  %v47 = vpack.c.b16 %v43, %v41
  %v48 = vpack.c.b16 %v44, %v42
  %v49 = vpack.c.b16 %v45, %v45
  %v50 = vpack.c.b16 %v46, %v46
  %vm53 = vcmask 154624
  %v55 = vsel %vm53, %v22, 0
  %vm57 = vcmask 1040384
  %vm58 = vcmask 1041408
  %v59 = vsel %vm57, 4294967295, 65535
  %v60 = vsel %vm58, %v59, 0
  %v62 = vand.u32 %v49, %v60
  %v65 = vand.u32 %v50, %v60
  %67 = vmatprep.subr.bf16.mxu0 0
  %68 = vmatpush1.bf16.msra.mxu0 0
  %69 = vmatprep.subr.bf16.mxu0 0
  %70 = vmatpush1.bf16.msra.mxu0 0
  %71 = vmatprep.subr.bf16.mxu0 0
  %72 = vmatpush1.bf16.msra.mxu0 0
  %73 = vmatprep.subr.bf16.mxu0 0
  %74 = vmatpush1.bf16.msra.mxu0 0
  %75 = vmatprep.subr.bf16.mxu0 0
  %76 = vmatpush1.bf16.msra.mxu0 0
  %77 = vmatprep.subr.bf16.mxu0 0
  %78 = vmatpush1.bf16.msra.mxu0 0
  %79 = vmatprep.subr.bf16.mxu0 %v65
  %80 = vmatpush1.bf16.msra.mxu0 %v62
  %81 = vmatprep.subr.bf16.mxu0 %v48
  %82 = vmatpush1.bf16.msra.mxu0 %v47
  %83 = vmatprep.subr.bf16.mxu0 0
  %84 = vmatpush2.bf16.msra.mxu0 0
  %85 = vmatprep.subr.bf16.mxu0 0
  %86 = vmatpush2.bf16.msra.mxu0 0
  %87 = vmatprep.subr.bf16.mxu0 0
  %88 = vmatpush2.bf16.msra.mxu0 0
  %89 = vmatprep.subr.bf16.mxu0 0
  %90 = vmatpush2.bf16.msra.mxu0 0
  %91 = vmatprep.subr.bf16.mxu0 0
  %92 = vmatpush2.bf16.msra.mxu0 0
  %93 = vmatprep.subr.bf16.mxu0 0
  %94 = vmatpush2.bf16.msra.mxu0 0
  %95 = vmatprep.subr.bf16.mxu0 0
  %96 = vmatpush2.bf16.msra.mxu0 0
  %97 = vmatprep.subr.bf16.mxu0 0
  %98 = vmatpush2.bf16.msra.mxu0 0
  %99 = vmatprep.mubr.bf16.mxu0 0
  %100 = vmatmul.mubr.bf16.gmra.mxu0 %v55
  %v101 = vpop.f32.mrf.mxu0
  %v102 = vadd.f32 %v31, %v101
  %v103 = vpop.f32.mrf.mxu0
  %v104 = vadd.f32 %v35, %v103
  %v105 = vpop.f32.mrf.mxu0
  %v106 = vpop.f32.mrf.mxu0
  %107 = vdwg.mxu0
  %v108 = vmax.f32 %v102, 0.0
  %v109 = vmax.f32 %v104, 0.0
  %v110 = vpack.c.bf16 %v108, %v108
  %v111 = vpack.c.bf16 %v109, %v109
  %v112 = vld [vmem:[%s3] sm:$0xf]
  %v113 = vld [vmem:[%s3 + $0x4] sm:$0xf]
  %v114 = vld [vmem:[%s3 + $0x8] sm:$0xf]
  %v115 = vld [vmem:[%s3 + $0xc] sm:$0xf]
  %v116 = vld [vmem:[%s3 + $0x10] sm:$0xf]
  %v117 = vld [vmem:[%s3 + $0x14] sm:$0xf]
  %v118 = vld [vmem:[%s3 + $0x18] sm:$0xf]
  %v119 = vld [vmem:[%s3 + $0x1c] sm:$0xf]
  %v120 = vld [vmem:[%s3 + $0x20] sm:$0xf]
  %v121 = vld [vmem:[%s3 + $0x24] sm:$0xf]
  %v122 = vld [vmem:[%s3 + $0x28] sm:$0xf]
  %v123 = vld [vmem:[%s3 + $0x2c] sm:$0xf]
  %v124 = vld [vmem:[%s3 + $0x30] sm:$0xf]
  %v125 = vld [vmem:[%s3 + $0x34] sm:$0xf]
  %v126 = vld [vmem:[%s3 + $0x38] sm:$0xf]
  %v127 = vld [vmem:[%s3 + $0x3c] sm:$0xf]
  %v128 = vld [vmem:[%s3 + $0x40] sm:$0xf]
  %v129 = vld [vmem:[%s3 + $0x44] sm:$0xf]
  %v130 = vld [vmem:[%s3 + $0x48] sm:$0xf]
  %v131 = vld [vmem:[%s3 + $0x4c] sm:$0xf]
  %v132 = vld [vmem:[%s3 + $0x50] sm:$0xf]
  %v133 = vld [vmem:[%s3 + $0x54] sm:$0xf]
  %v134 = vld [vmem:[%s3 + $0x58] sm:$0xf]
  %v135 = vld [vmem:[%s3 + $0x5c] sm:$0xf]
  %v136 = vld [vmem:[%s3 + $0x60] sm:$0xf]
  %v137 = vld [vmem:[%s3 + $0x64] sm:$0xf]
  %v138 = vld [vmem:[%s3 + $0x68] sm:$0xf]
  %v139 = vld [vmem:[%s3 + $0x6c] sm:$0xf]
  %v140 = vld [vmem:[%s3 + $0x70] sm:$0xf]
  %v141 = vld [vmem:[%s3 + $0x74] sm:$0xf]
  %v142 = vld [vmem:[%s3 + $0x78] sm:$0xf]
  %v143 = vld [vmem:[%s3 + $0x7c] sm:$0xf]
  %v144 = vld [vmem:[%s4] sm:$0x1]
  %v146 = vlaneseq
  %v147 = vshrl.u32 %v146, 7
  %v148 = vsub.s32 0, %v147
  %v149 = vrot.slane %v144, %v148
  %v183 = vunpack.c.l.b16 %v112
  %v184 = vunpack.c.l.b16 %v113
  %v185 = vunpack.c.l.b16 %v114
  %v186 = vunpack.c.l.b16 %v115
  %v187 = vunpack.c.l.b16 %v116
  %v188 = vunpack.c.l.b16 %v117
  %v189 = vunpack.c.l.b16 %v118
  %v190 = vunpack.c.l.b16 %v119
  %v191 = vunpack.c.l.b16 %v120
  %v192 = vunpack.c.l.b16 %v121
  %v193 = vunpack.c.l.b16 %v122
  %v194 = vunpack.c.l.b16 %v123
  %v195 = vunpack.c.l.b16 %v124
  %v196 = vunpack.c.l.b16 %v125
  %v197 = vunpack.c.l.b16 %v126
  %v198 = vunpack.c.l.b16 %v127
  %v199 = vunpack.c.l.b16 %v128
  %v200 = vunpack.c.l.b16 %v129
  %v201 = vunpack.c.l.b16 %v130
  %v202 = vunpack.c.l.b16 %v131
  %v203 = vunpack.c.l.b16 %v132
  %v204 = vunpack.c.l.b16 %v133
  %v205 = vunpack.c.l.b16 %v134
  %v206 = vunpack.c.l.b16 %v135
  %v207 = vunpack.c.l.b16 %v136
  %v208 = vunpack.c.l.b16 %v137
  %v209 = vunpack.c.l.b16 %v138
  %v210 = vunpack.c.l.b16 %v139
  %v211 = vunpack.c.l.b16 %v140
  %v212 = vunpack.c.l.b16 %v141
  %v213 = vunpack.c.l.b16 %v142
  %v214 = vunpack.c.l.b16 %v143
  %v215 = vpack.c.b16 %v184, %v183
  %v216 = vpack.c.b16 %v186, %v185
  %v217 = vpack.c.b16 %v188, %v187
  %v218 = vpack.c.b16 %v190, %v189
  %v219 = vpack.c.b16 %v192, %v191
  %v220 = vpack.c.b16 %v194, %v193
  %v221 = vpack.c.b16 %v196, %v195
  %v222 = vpack.c.b16 %v198, %v197
  %v223 = vpack.c.b16 %v200, %v199
  %v224 = vpack.c.b16 %v202, %v201
  %v225 = vpack.c.b16 %v204, %v203
  %v226 = vpack.c.b16 %v206, %v205
  %v227 = vpack.c.b16 %v208, %v207
  %v228 = vpack.c.b16 %v210, %v209
  %v229 = vpack.c.b16 %v212, %v211
  %v230 = vpack.c.b16 %v214, %v213
  %247 = vmatprep.subr.bf16.mxu0 0
  %248 = vmatpush1.bf16.msra.mxu0 %v222
  %249 = vmatprep.subr.bf16.mxu0 0
  %250 = vmatpush1.bf16.msra.mxu0 %v221
  %251 = vmatprep.subr.bf16.mxu0 0
  %252 = vmatpush1.bf16.msra.mxu0 %v220
  %253 = vmatprep.subr.bf16.mxu0 0
  %254 = vmatpush1.bf16.msra.mxu0 %v219
  %255 = vmatprep.subr.bf16.mxu0 0
  %256 = vmatpush1.bf16.msra.mxu0 %v218
  %257 = vmatprep.subr.bf16.mxu0 0
  %258 = vmatpush1.bf16.msra.mxu0 %v217
  %259 = vmatprep.subr.bf16.mxu0 0
  %260 = vmatpush1.bf16.msra.mxu0 %v216
  %261 = vmatprep.subr.bf16.mxu0 0
  %262 = vmatpush1.bf16.msra.mxu0 %v215
  %263 = vmatprep.subr.bf16.mxu0 0
  %264 = vmatpush2.bf16.msra.mxu0 %v230
  %265 = vmatprep.subr.bf16.mxu0 0
  %266 = vmatpush2.bf16.msra.mxu0 %v229
  %267 = vmatprep.subr.bf16.mxu0 0
  %268 = vmatpush2.bf16.msra.mxu0 %v228
  %269 = vmatprep.subr.bf16.mxu0 0
  %270 = vmatpush2.bf16.msra.mxu0 %v227
  %271 = vmatprep.subr.bf16.mxu0 0
  %272 = vmatpush2.bf16.msra.mxu0 %v226
  %273 = vmatprep.subr.bf16.mxu0 0
  %274 = vmatpush2.bf16.msra.mxu0 %v225
  %275 = vmatprep.subr.bf16.mxu0 0
  %276 = vmatpush2.bf16.msra.mxu0 %v224
  %277 = vmatprep.subr.bf16.mxu0 0
  %278 = vmatpush2.bf16.msra.mxu0 %v223
  %279 = vmatprep.mubr.bf16.mxu0 %v111
  %280 = vmatmul.mubr.bf16.gmra.mxu0 %v110
  %v281 = vpop.f32.mrf.mxu0
  %v282 = vadd.f32 %v149, %v281
  %v283 = vpop.f32.mrf.mxu0
  %v284 = vpop.f32.mrf.mxu0
  %v285 = vpop.f32.mrf.mxu0
  %286 = vdwg.mxu0
  %vm287 = vcmask 15360
  %288 = vst.msk [vmem:[%s5] sm:$0xff] %vm287, %v282
  // Predicated region
  $region22: #{my_model_forward.1} parent=0 // pred_check
    _
  $region23: #{my_model_forward.1} parent=0 // pred_check_branch
    %290 = sbr.rel (0) target = $region25
  $region24: #{my_model_forward.1} parent=0 // pred_region
    _
  $region25: #{my_model_forward.1} parent=0 // pred_fallthru
    _
  // Predicated region
  $region26: #{my_model_forward.1} parent=0 // pred_check
    _
  $region27: #{my_model_forward.1} parent=0 // pred_check_branch
    %292 = sbr.rel (0) target = $region29
  $region28: #{my_model_forward.1} parent=0 // pred_region
    _
  $region29: #{my_model_forward.1} parent=0 // pred_fallthru
    _

</llo_original>
